<compile_context>
chip_gen: v7x
topology: tpu7x:2x2x1
jax: 0.10.0
libtpu: 0.0.40
codegen_flags: <defaults>
</compile_context>

<pallas_src>
import jax
import jax.numpy as jnp
from jax import lax
from jax.experimental import pallas as pl
from jax.experimental.pallas import tpu as pltpu

EPSILON = 0.1
_NEG_INF = float("-inf")

# Bytes/element of in-kernel full-tile temporaries on top of the double-buffered
# native-dtype input tile: the f32 copy of x, the (x - m)/exp temp and the
# compare/select of the one-hot gather (conservative accounting).
_TEMP_BYTES_PER_ELEM = 16


def _make_kernel(n_classes, tc, mask_last_class_tile):
    """Kernel for one (TB, TC) preds tile; online logsumexp across class tiles."""

    def kernel(preds_ref, target_ref, out_ref, m_acc, s_acc, sx_acc, xt_acc):
        c_idx = pl.program_id(1)

        @pl.when(c_idx == 0)
        def _():
            m_acc[...] = jnp.full(m_acc.shape, _NEG_INF, jnp.float32)
            s_acc[...] = jnp.zeros(s_acc.shape, jnp.float32)
            sx_acc[...] = jnp.zeros(sx_acc.shape, jnp.float32)
            xt_acc[...] = jnp.zeros(xt_acc.shape, jnp.float32)

        x = preds_ref[...]                       # (TB, TC), native dtype
        tgt = target_ref[...]                    # (TB, 1) int32

        # Global class index per lane; (1, TC) iota broadcasts against the
        # (TB, 1) target / the C bound -- no (TB, TC) int32 iota temp.
        col = c_idx * tc + lax.broadcasted_iota(jnp.int32, (1, tc), 1)

        # x[i, target[i]] via masked lane-sum on the native dtype (exact: one
        # non-zero per row).  Requires 0 <= target < C.
        x_tgt = jnp.sum(jnp.where(col == tgt, x, jnp.zeros_like(x)),
                        axis=-1, keepdims=True, dtype=jnp.float32)
        xt_acc[...] += x_tgt

        x_stats = x
        if mask_last_class_tile:
            valid = col < n_classes              # (1, TC), static-flagged path
            x_stats = jnp.where(valid, x, jnp.asarray(_NEG_INF, x.dtype))

        # Block max on the native dtype (exact), then a single f32 cast for the
        # exp/sum passes.
        m_blk = jnp.max(x_stats, axis=-1, keepdims=True).astype(jnp.float32)
        m_prev = m_acc[...]
        m_new = jnp.maximum(m_prev, m_blk)

        xf = x.astype(jnp.float32)
        e = jnp.exp(xf - m_new)
        if mask_last_class_tile:
            e = jnp.where(valid, e, 0.0)
            xf = jnp.where(valid, xf, 0.0)

        alpha = jnp.exp(m_prev - m_new)          # 0 on the first class step
        s_acc[...] = alpha * s_acc[...] + jnp.sum(e, axis=-1, keepdims=True)
        sx_acc[...] += jnp.sum(xf, axis=-1, keepdims=True)
        m_acc[...] = m_new

        @pl.when(c_idx == pl.num_programs(1) - 1)
        def _():
            lse = m_acc[...] + jnp.log(s_acc[...])
            out_ref[:, 0:1] = jnp.float32(n_classes) * lse - sx_acc[...]
            out_ref[:, 1:2] = lse - xt_acc[...]

    return kernel


def _round_up(x, m):
    return ((x + m - 1) // m) * m


def _tpu_vmem_capacity_bytes():
    try:
        return int(pltpu.get_tpu_info().vmem_capacity_bytes)
    except Exception:
        return 64 << 20  # conservative fallback: v7x per-TensorCore VMEM


def _pick_tiling(batch, n_classes, itemsize):
    """Returns (TB, TC, vmem_limit_bytes), temp-aware so tiles fit scoped VMEM."""
    phys = _tpu_vmem_capacity_bytes()
    # v5e/v6e (128 MiB physical) -> 64 MiB scoped; v7x (64 MiB) -> 32 MiB.
    vmem_limit = min(phys // 2, 64 << 20)
    budget = (vmem_limit * 3) // 4            # headroom for target/out/accumulators
    per_elem = 2 * itemsize + _TEMP_BYTES_PER_ELEM

    tb = budget // max(per_elem * n_classes, 1)
    if tb >= 8:
        tc = n_classes                        # full class axis per tile
    else:
        # Huge vocab (matters on v7x's 64 MiB VMEM): tile the class axis and
        # reduce with an online logsumexp instead of shrinking TB below 8.
        tb = 128
        tc = (budget // (per_elem * tb) // 128) * 128
        tc = max(128, min(tc, (n_classes // 128) * 128))

    tb = min(tb, 8192)                        # bytes-based cap, not a hard 1024
    if batch < 8:
        tb = batch                            # block == full dim is always legal
    else:
        tb = min(tb, (batch // 8) * 8)
        if batch >= 16:
            # >= 2 batch grid steps so both v7x TensorCores get work; negligible
            # extra step overhead on single-TC v5e/v6e.
            tb = min(tb, _round_up(pl.cdiv(batch, 2), 8))
        tb = max(8, (tb // 8) * 8)
    return int(tb), int(tc), int(vmem_limit)


def label_smoothing_loss(preds, target, epsilon=EPSILON, block_sizes=None):
    """preds: (B, C) float (any dtype), target: (B,) int in [0, C). Returns (B,) f32."""
    B, C = preds.shape
    target2d = target.astype(jnp.int32).reshape(B, 1)

    if block_sizes is None:
        TB, TC, vmem_limit = _pick_tiling(B, C, jnp.dtype(preds.dtype).itemsize)
    else:                                      # test/override hook
        TB, TC = block_sizes
        vmem_limit = min(_tpu_vmem_capacity_bytes() // 2, 64 << 20)

    nb = pl.cdiv(B, TB)
    nc = pl.cdiv(C, TC)
    mask_last = (C % TC) != 0                  # static; zero cost when divisible

    partials = pl.pallas_call(
        _make_kernel(C, TC, mask_last),
        out_shape=jax.ShapeDtypeStruct((B, 2), jnp.float32),
        grid_spec=pltpu.PrefetchScalarGridSpec(
            num_scalar_prefetch=0,
            grid=(nb, nc),
            in_specs=[
                pl.BlockSpec((TB, TC), lambda i, c: (i, c)),   # preds, native dtype
                pl.BlockSpec((TB, 1), lambda i, c: (i, 0)),    # target
            ],
            out_specs=pl.BlockSpec((TB, 2), lambda i, c: (i, 0)),
            scratch_shapes=[pltpu.VMEM((TB, 1), jnp.float32)] * 4,
        ),
        compiler_params=pltpu.CompilerParams(
            dimension_semantics=("parallel", "arbitrary"),
            vmem_limit_bytes=vmem_limit,
        ),
    )(preds, target2d)

    neg_row_sum = partials[:, 0]               # (B,)
    nll = partials[:, 1]                       # (B,)
    loss = jnp.mean(neg_row_sum)               # batch mean (no padded rows exist)
    return epsilon * (loss / jnp.float32(C)) + (1.0 - epsilon) * nll


def _reference(preds, target, eps=EPSILON):
    log_preds = jax.nn.log_softmax(preds.astype(jnp.float32), axis=-1)
    n = preds.shape[-1]
    loss = jnp.mean(-jnp.sum(log_preds, axis=-1))
    nll = -jnp.take_along_axis(log_preds, target[:, None].astype(jnp.int32), axis=-1)[:, 0]
    return eps * (loss / n) + (1.0 - eps) * nll


def _check(preds, target, atol, rtol, block_sizes=None):
    out = jax.block_until_ready(label_smoothing_loss(preds, target, block_sizes=block_sizes))
    ref = _reference(preds, target)
    assert out.shape == ref.shape, (out.shape, ref.shape)
    assert jnp.allclose(out, ref, atol=atol, rtol=rtol), (out, ref)


if __name__ == "__main__":
    key = jax.random.PRNGKey(0)
    k1, k2, k3, k4 = jax.random.split(key, 4)

    # Default path: single (TB=8, TC=C) tile.
    B, C = 8, 32
    preds = jax.random.normal(k1, (B, C), dtype=jnp.float32)
    target = jax.random.randint(k2, (B,), 0, C, dtype=jnp.int32)
    _check(preds, target, 1e-5, 1e-5)

    # bf16 inputs: streamed in native dtype, f32 math in-kernel.
    _check(preds.astype(jnp.bfloat16), target, 1e-3, 1e-3)

    # Ragged batch (B % TB != 0): no wrapper-side pad; OOB rows of the last
    # tile are computed on garbage and dropped at writeback.
    Br, Cr = 12, 48
    preds_r = jax.random.normal(k3, (Br, Cr), dtype=jnp.float32)
    target_r = jax.random.randint(k4, (Br,), 0, Cr, dtype=jnp.int32)
    _check(preds_r, target_r, 1e-5, 1e-5)

    # Class-tiled online-logsumexp path (forced small for the test):
    # evenly divisible class tiles ...
    Bt, Ct = 8, 384
    preds_t = jax.random.normal(k1, (Bt, Ct), dtype=jnp.float32)
    target_t = jax.random.randint(k2, (Bt,), 0, Ct, dtype=jnp.int32)
    _check(preds_t, target_t, 1e-4, 1e-4, block_sizes=(8, 128))

    # ... and a ragged (masked) last class tile.
    Bm, Cm = 8, 320
    preds_m = jax.random.normal(k3, (Bm, Cm), dtype=jnp.float32)
    target_m = jax.random.randint(k4, (Bm,), 0, Cm, dtype=jnp.int32)
    _check(preds_m, target_m, 1e-4, 1e-4, block_sizes=(8, 128))

    print("KERNEL_OK")
</pallas_src>

<mosaic_0001>
module attributes {stable_mosaic.version = 11 : i64} {
  func.func @kernel(%arg0: i32, %arg1: i32, %arg2: memref<8x32xf32, #tpu.memory_space<vmem>>, %arg3: memref<8x1xi32, #tpu.memory_space<vmem>>, %arg4: memref<8x2xf32, #tpu.memory_space<vmem>>, %arg5: memref<8x1xf32, #tpu.memory_space<vmem>>, %arg6: memref<8x1xf32, #tpu.memory_space<vmem>>, %arg7: memref<8x1xf32, #tpu.memory_space<vmem>>, %arg8: memref<8x1xf32, #tpu.memory_space<vmem>>) attributes {dimension_semantics = [#tpu.dimension_semantics<parallel>, #tpu.dimension_semantics<arbitrary>], iteration_bounds = array<i64: 1, 1>, scalar_prefetch = 0 : i64, scratch_operands = 4 : i64, tpu.core_type = #tpu.core_type<tc>, window_params = [{transform_indices = @transform_0, window_bounds = array<i64: 8, 32>}, {transform_indices = @transform_1, window_bounds = array<i64: 8, 1>}, {transform_indices = @transform_2, window_bounds = array<i64: 8, 2>}]} {
    %c0_i32 = arith.constant 0 : i32
    %0 = arith.cmpi eq, %arg1, %c0_i32 : i32
    %1 = arith.extui %0 : i1 to i32
    %c0_i32_0 = arith.constant 0 : i32
    %2 = arith.cmpi ne, %1, %c0_i32_0 : i32
    scf.if %2 {
      %cst_26 = arith.constant 0xFF800000 : f32
      %43 = vector.broadcast %cst_26 : f32 to vector<8x1xf32>
      %c0_27 = arith.constant 0 : index
      %c0_28 = arith.constant 0 : index
      %44 = vector.load %arg5[%c0_27, %c0_28] : memref<8x1xf32, #tpu.memory_space<vmem>>, vector<8x1xf32>
      tpu.vector_store %arg5[%c0_27, %c0_28], %43 {strides = array<i32>} : memref<8x1xf32, #tpu.memory_space<vmem>>, vector<8x1xf32>,
      %cst_29 = arith.constant 0.000000e+00 : f32
      %45 = vector.broadcast %cst_29 : f32 to vector<8x1xf32>
      %c0_30 = arith.constant 0 : index
      %c0_31 = arith.constant 0 : index
      %46 = vector.load %arg6[%c0_30, %c0_31] : memref<8x1xf32, #tpu.memory_space<vmem>>, vector<8x1xf32>
      tpu.vector_store %arg6[%c0_30, %c0_31], %45 {strides = array<i32>} : memref<8x1xf32, #tpu.memory_space<vmem>>, vector<8x1xf32>,
      %cst_32 = arith.constant 0.000000e+00 : f32
      %47 = vector.broadcast %cst_32 : f32 to vector<8x1xf32>
      %c0_33 = arith.constant 0 : index
      %c0_34 = arith.constant 0 : index
      %48 = vector.load %arg7[%c0_33, %c0_34] : memref<8x1xf32, #tpu.memory_space<vmem>>, vector<8x1xf32>
      tpu.vector_store %arg7[%c0_33, %c0_34], %47 {strides = array<i32>} : memref<8x1xf32, #tpu.memory_space<vmem>>, vector<8x1xf32>,
      %cst_35 = arith.constant 0.000000e+00 : f32
      %49 = vector.broadcast %cst_35 : f32 to vector<8x1xf32>
      %c0_36 = arith.constant 0 : index
      %c0_37 = arith.constant 0 : index
      %50 = vector.load %arg8[%c0_36, %c0_37] : memref<8x1xf32, #tpu.memory_space<vmem>>, vector<8x1xf32>
      tpu.vector_store %arg8[%c0_36, %c0_37], %49 {strides = array<i32>} : memref<8x1xf32, #tpu.memory_space<vmem>>, vector<8x1xf32>,
    } else {
    }
    %c0 = arith.constant 0 : index
    %c0_1 = arith.constant 0 : index
    %3 = vector.load %arg2[%c0, %c0_1] : memref<8x32xf32, #tpu.memory_space<vmem>>, vector<8x32xf32>
    %c0_2 = arith.constant 0 : index
    %c0_3 = arith.constant 0 : index
    %4 = vector.load %arg3[%c0_2, %c0_3] : memref<8x1xi32, #tpu.memory_space<vmem>>, vector<8x1xi32>
    %c32_i32 = arith.constant 32 : i32
    %5 = arith.muli %arg1, %c32_i32 : i32
    %6 = tpu.iota {dimensions = array<i32: 1>} : vector<1x32xi32>
    %7 = vector.broadcast %5 : i32 to vector<1x32xi32>
    %8 = arith.addi %7, %6 : vector<1x32xi32>
    %9 = vector.broadcast %8 : vector<1x32xi32> to vector<8x32xi32>
    %10 = vector.broadcast %4 : vector<8x1xi32> to vector<8x32xi32>
    %11 = arith.cmpi eq, %9, %10 : vector<8x32xi32>
    %cst = arith.constant 0.000000e+00 : f32
    %12 = vector.broadcast %cst : f32 to vector<8x32xf32>
    %13 = arith.select %11, %3, %12 : vector<8x32xi1>, vector<8x32xf32>
    %cst_4 = arith.constant dense<0.000000e+00> : vector<8xf32>
    %14 = vector.multi_reduction <add>, %13, %cst_4 [1] : vector<8x32xf32> to vector<8xf32>
    %15 = vector.shape_cast %14 : vector<8xf32> to vector<8x1xf32>
    %c0_5 = arith.constant 0 : index
    %c0_6 = arith.constant 0 : index
    %16 = vector.load %arg8[%c0_5, %c0_6] : memref<8x1xf32, #tpu.memory_space<vmem>>, vector<8x1xf32>
    %17 = arith.addf %16, %15 : vector<8x1xf32>
    %c0_7 = arith.constant 0 : index
    %c0_8 = arith.constant 0 : index
    %18 = vector.load %arg8[%c0_7, %c0_8] : memref<8x1xf32, #tpu.memory_space<vmem>>, vector<8x1xf32>
    tpu.vector_store %arg8[%c0_7, %c0_8], %17 {strides = array<i32>} : memref<8x1xf32, #tpu.memory_space<vmem>>, vector<8x1xf32>,
    %cst_9 = arith.constant dense<0xFF800000> : vector<8xf32>
    %19 = vector.multi_reduction <maximumf>, %3, %cst_9 [1] : vector<8x32xf32> to vector<8xf32>
    %20 = vector.shape_cast %19 : vector<8xf32> to vector<8x1xf32>
    %c0_10 = arith.constant 0 : index
    %c0_11 = arith.constant 0 : index
    %21 = vector.load %arg5[%c0_10, %c0_11] : memref<8x1xf32, #tpu.memory_space<vmem>>, vector<8x1xf32>
    %22 = arith.maximumf %21, %20 : vector<8x1xf32>
    %23 = vector.broadcast %22 : vector<8x1xf32> to vector<8x32xf32>
    %24 = arith.subf %3, %23 : vector<8x32xf32>
    %25 = math.exp %24 : vector<8x32xf32>
    %26 = arith.subf %21, %22 : vector<8x1xf32>
    %27 = math.exp %26 : vector<8x1xf32>
    %c0_12 = arith.constant 0 : index
    %c0_13 = arith.constant 0 : index
    %28 = vector.load %arg6[%c0_12, %c0_13] : memref<8x1xf32, #tpu.memory_space<vmem>>, vector<8x1xf32>
    %29 = arith.mulf %27, %28 : vector<8x1xf32>
    %cst_14 = arith.constant dense<0.000000e+00> : vector<8xf32>
    %30 = vector.multi_reduction <add>, %25, %cst_14 [1] : vector<8x32xf32> to vector<8xf32>
    %31 = vector.shape_cast %30 : vector<8xf32> to vector<8x1xf32>
    %32 = arith.addf %29, %31 : vector<8x1xf32>
    %c0_15 = arith.constant 0 : index
    %c0_16 = arith.constant 0 : index
    %33 = vector.load %arg6[%c0_15, %c0_16] : memref<8x1xf32, #tpu.memory_space<vmem>>, vector<8x1xf32>
    tpu.vector_store %arg6[%c0_15, %c0_16], %32 {strides = array<i32>} : memref<8x1xf32, #tpu.memory_space<vmem>>, vector<8x1xf32>,
    %c0_17 = arith.constant 0 : index
    %c0_18 = arith.constant 0 : index
    %34 = vector.load %arg7[%c0_17, %c0_18] : memref<8x1xf32, #tpu.memory_space<vmem>>, vector<8x1xf32>
    %cst_19 = arith.constant dense<0.000000e+00> : vector<8xf32>
    %35 = vector.multi_reduction <add>, %3, %cst_19 [1] : vector<8x32xf32> to vector<8xf32>
    %36 = vector.shape_cast %35 : vector<8xf32> to vector<8x1xf32>
    %37 = arith.addf %34, %36 : vector<8x1xf32>
    %c0_20 = arith.constant 0 : index
    %c0_21 = arith.constant 0 : index
    %38 = vector.load %arg7[%c0_20, %c0_21] : memref<8x1xf32, #tpu.memory_space<vmem>>, vector<8x1xf32>
    tpu.vector_store %arg7[%c0_20, %c0_21], %37 {strides = array<i32>} : memref<8x1xf32, #tpu.memory_space<vmem>>, vector<8x1xf32>,
    %c0_22 = arith.constant 0 : index
    %c0_23 = arith.constant 0 : index
    %39 = vector.load %arg5[%c0_22, %c0_23] : memref<8x1xf32, #tpu.memory_space<vmem>>, vector<8x1xf32>
    tpu.vector_store %arg5[%c0_22, %c0_23], %22 {strides = array<i32>} : memref<8x1xf32, #tpu.memory_space<vmem>>, vector<8x1xf32>,
    %c0_i32_24 = arith.constant 0 : i32
    %40 = arith.cmpi eq, %arg1, %c0_i32_24 : i32
    %41 = arith.extui %40 : i1 to i32
    %c0_i32_25 = arith.constant 0 : i32
    %42 = arith.cmpi ne, %41, %c0_i32_25 : i32
    scf.if %42 {
      %c0_26 = arith.constant 0 : index
      %c0_27 = arith.constant 0 : index
      %43 = vector.load %arg5[%c0_26, %c0_27] : memref<8x1xf32, #tpu.memory_space<vmem>>, vector<8x1xf32>
      %c0_28 = arith.constant 0 : index
      %c0_29 = arith.constant 0 : index
      %44 = vector.load %arg6[%c0_28, %c0_29] : memref<8x1xf32, #tpu.memory_space<vmem>>, vector<8x1xf32>
      %45 = math.log %44 : vector<8x1xf32>
      %46 = arith.addf %43, %45 : vector<8x1xf32>
      %cst_30 = arith.constant 3.200000e+01 : f32
      %47 = vector.broadcast %cst_30 : f32 to vector<8x1xf32>
      %48 = arith.mulf %47, %46 : vector<8x1xf32>
      %c0_31 = arith.constant 0 : index
      %c0_32 = arith.constant 0 : index
      %49 = vector.load %arg7[%c0_31, %c0_32] : memref<8x1xf32, #tpu.memory_space<vmem>>, vector<8x1xf32>
      %50 = arith.subf %48, %49 : vector<8x1xf32>
      %c0_33 = arith.constant 0 : index
      %c0_34 = arith.constant 0 : index
      %51 = vector.load %arg4[%c0_33, %c0_34] : memref<8x2xf32, #tpu.memory_space<vmem>>, vector<8x1xf32>
      tpu.vector_store %arg4[%c0_33, %c0_34], %50 {strides = array<i32>} : memref<8x2xf32, #tpu.memory_space<vmem>>, vector<8x1xf32>,
      %c0_35 = arith.constant 0 : index
      %c0_36 = arith.constant 0 : index
      %52 = vector.load %arg8[%c0_35, %c0_36] : memref<8x1xf32, #tpu.memory_space<vmem>>, vector<8x1xf32>
      %53 = arith.subf %46, %52 : vector<8x1xf32>
      %c0_37 = arith.constant 0 : index
      %c1 = arith.constant 1 : index
      %54 = vector.load %arg4[%c0_37, %c1] : memref<8x2xf32, #tpu.memory_space<vmem>>, vector<8x1xf32>
      tpu.vector_store %arg4[%c0_37, %c1], %53 {strides = array<i32>} : memref<8x2xf32, #tpu.memory_space<vmem>>, vector<8x1xf32>,
    } else {
    }
    return
  }
  func.func @transform_0(%arg0: i32, %arg1: i32) -> (i32, i32) {
    %c0_i32 = arith.constant 0 : i32
    return %arg0, %arg1 : i32, i32
  }
  func.func @transform_1(%arg0: i32, %arg1: i32) -> (i32, i32) {
    %c0_i32 = arith.constant 0 : i32
    %c0_i32_0 = arith.constant 0 : i32
    return %arg0, %c0_i32 : i32, i32
  }
  func.func @transform_2(%arg0: i32, %arg1: i32) -> (i32, i32) {
    %c0_i32 = arith.constant 0 : i32
    %c0_i32_0 = arith.constant 0 : i32
    return %arg0, %c0_i32 : i32, i32
  }
}

</mosaic_0001>

<llo_original>
// kernel: tpu_custom_call.1
$region0: #{tpu_custom_call.1}
  #allocation0 [shape = 'u32[]', space=smem, size = 0x4, offset = 0x4, fixed_abs, tag = 'smem constant byte address 0x4 - core index']
  #allocation1 [shape = 'u32[144,128]{1,0:T(1,128)}', space=vmem, size = 0x12000, scoped, tag = 'internal scratch']
  #allocation2 [shape = 'f32[8,1]{1,0:T(8,128)}', space=vmem, size = 0x1000, scoped, tag = 'scratch operand']
  #allocation3 [shape = 'f32[8,1]{1,0:T(8,128)}', space=vmem, size = 0x1000, scoped, tag = 'scratch operand']
  #allocation4 [shape = 'f32[8,1]{1,0:T(8,128)}', space=vmem, size = 0x1000, scoped, tag = 'scratch operand']
  #allocation5 [shape = 'f32[8,1]{1,0:T(8,128)}', space=vmem, size = 0x1000, scoped, tag = 'scratch operand']
  %s0 = inlined_call_operand.vmem [shape: f32[8,32], index: 0, kind: input, shape index: {}]
  %s1 = inlined_call_operand.vmem [shape: s32[8,1], index: 1, kind: input, shape index: {}]
  %s2 = inlined_call_operand.vmem [shape: f32[8,2], index: 2, kind: output, shape index: {}]
  %s3 = sld [smem:[#allocation0]]
  $region26: #{tpu_custom_call.1} parent=0
    _
  %s5 = ssub.s32 1, %s3
  %s6 = scalar_select 0, %s5, %s3
  // Predicated region
  $region2: #{tpu_custom_call.1} parent=0 // pred_check
    _
  $region3: #{tpu_custom_call.1} parent=0 // pred_check_branch
    %8 = sbr.rel (0) target = $region5
  $region4: #{tpu_custom_call.1} parent=0 // pred_region
    _
  $region5: #{tpu_custom_call.1} parent=0 // pred_fallthru
    _
  // Predicated region
  $region6: #{tpu_custom_call.1} parent=0 // pred_check
    _
  $region7: #{tpu_custom_call.1} parent=0 // pred_check_branch
    %10 = sbr.rel (0) target = $region9
  $region8: #{tpu_custom_call.1} parent=0 // pred_region
    _
  $region9: #{tpu_custom_call.1} parent=0 // pred_fallthru
    _
  %p11 = scmp.eq.s32.totalorder 0, 0
  // Predicated region
  $region10: #{tpu_custom_call.1} parent=0 // pred_check
    %p12 = pneg %p11
  $region11: #{tpu_custom_call.1} parent=0 // pred_check_branch
    %14 = sbr.rel (%p12) target = $region13
  $region12: #{tpu_custom_call.1} parent=0 // pred_region
    %vm15 = vcmask 7168
    %16 = vst.msk [vmem:[#allocation2] sm:$0xff] %vm15, -inf
    %17 = vst.msk [vmem:[#allocation3] sm:$0xff] %vm15, 0.0
    %18 = vst.msk [vmem:[#allocation4] sm:$0xff] %vm15, 0.0
    %19 = vst.msk [vmem:[#allocation5] sm:$0xff] %vm15, 0.0
  $region13: #{tpu_custom_call.1} parent=0 // pred_fallthru
    _
  %v20 = vld [vmem:[%s0] sm:$0xff]
  %v21 = vld [vmem:[%s1] sm:$0xff]
  %s22 = smul.u32 0, 32
  %v23 = vlaneseq
  %v24 = vand.u32 %v23, 127
  %v25 = vstv %s22
  %v26 = vadd.s32 %v25, %v24
  %27 = vset.pattern.permute.xlu0 0
  %28 = vperm.xlu0 %27, %v21
  %v29 = vpop.permute.xlu0 %28
  %vm30 = vcmp.eq.s32.totalorder %v26, %v29
  %v31 = vsel %vm30, %v20, 0.0
  %vm32 = vcmask 261120
  %v33 = vsel %vm32, %v31, 0.0
  %34 = vadd.xlane.f32.xlu0 %v33
  %v35 = vpop.xlane.xlu0 %34
  %v36 = vld [vmem:[#allocation5] sm:$0xff]
  %v37 = vadd.f32 %v36, %v35
  %vm38 = vcmask 7168
  %39 = vst.msk [vmem:[#allocation5] sm:$0xff] %vm38, %v37
  %v40 = vsel %vm32, %v20, -inf
  %41 = vmax.xlane.f32.xlu0 %v40
  %v42 = vpop.xlane.xlu0 %41
  %v43 = vld [vmem:[#allocation2] sm:$0xff]
  %v44 = vmax.f32 %v43, %v42
  %46 = vset.pattern.permute.xlu0 0
  %47 = vperm.xlu0 %46, %v44
  %v48 = vpop.permute.xlu0 %47
  %v50 = vsub.f32 %v20, %v48
  %v51 = vmul.f32 %v50, 1.442695
  %v52 = vpow.pop %v51
  %v53 = vsub.f32 %v43, %v44
  %v54 = vmul.f32 %v53, 1.442695
  %v55 = vpow.pop %v54
  %v56 = vld [vmem:[#allocation3] sm:$0xff]
  %v57 = vmul.f32 %v55, %v56
  %v58 = vsel %vm32, %v52, 0.0
  %59 = vadd.xlane.f32.xlu0 %v58
  %v60 = vpop.xlane.xlu0 %59
  %v61 = vadd.f32 %v57, %v60
  %62 = vst.msk [vmem:[#allocation3] sm:$0xff] %vm38, %v61
  %v63 = vld [vmem:[#allocation4] sm:$0xff]
  %v64 = vsel %vm32, %v20, 0.0
  %65 = vadd.xlane.f32.xlu0 %v64
  %v66 = vpop.xlane.xlu0 %65
  %v67 = vadd.f32 %v63, %v66
  %68 = vst.msk [vmem:[#allocation4] sm:$0xff] %vm38, %v67
  %69 = vst.msk [vmem:[#allocation2] sm:$0xff] %vm38, %v44
  // Predicated region
  $region14: #{tpu_custom_call.1} parent=0 // pred_check
    %p70 = pneg %p11
  $region15: #{tpu_custom_call.1} parent=0 // pred_check_branch
    %72 = sbr.rel (%p70) target = $region17
  $region16: #{tpu_custom_call.1} parent=0 // pred_region
    %v73 = vld [vmem:[#allocation2] sm:$0xff]
    %v74 = vld [vmem:[#allocation3] sm:$0xff]
    %v75 = vlog2.pop %v74
    %v76 = vmul.f32 %v75, 0.6931472
    %v77 = vadd.f32 %v73, %v76
    %v78 = vmul.f32 %v77, 32.0
    %v79 = vld [vmem:[#allocation4] sm:$0xff]
    %v80 = vsub.f32 %v78, %v79
    %81 = vst.msk [vmem:[%s2] sm:$0xff] %vm38, %v80
    %v82 = vld [vmem:[#allocation5] sm:$0xff]
    %v83 = vsub.f32 %v77, %v82
    %85 = vrot.lane.b32.xlu0 %v83, 1
    %v86 = vpop.permute.xlu0 %85
    %vm88 = vcmask 15368
    %89 = vst.msk [vmem:[%s2] sm:$0xff] %vm88, %v86
  $region17: #{tpu_custom_call.1} parent=0 // pred_fallthru
    _
  // Predicated region
  $region18: #{tpu_custom_call.1} parent=0 // pred_check
    _
  $region19: #{tpu_custom_call.1} parent=0 // pred_check_branch
    %91 = sbr.rel (0) target = $region21
  $region20: #{tpu_custom_call.1} parent=0 // pred_region
    _
  $region21: #{tpu_custom_call.1} parent=0 // pred_fallthru
    _
  // Predicated region
  $region22: #{tpu_custom_call.1} parent=0 // pred_check
    _
  $region23: #{tpu_custom_call.1} parent=0 // pred_check_branch
    %93 = sbr.rel (0) target = $region25
  $region24: #{tpu_custom_call.1} parent=0 // pred_region
    _
  $region25: #{tpu_custom_call.1} parent=0 // pred_fallthru
    _

</llo_original>
